<compile_context>
chip_gen: v6e
topology: v6e:2x2x1
jax: 0.10.0
libtpu: 0.0.40
codegen_flags: <defaults>
</compile_context>

<pallas_src>
import functools

import jax
import jax.numpy as jnp
from jax.experimental import pallas as pl
from jax.experimental.pallas import tpu as pltpu

LANE = 128
SUBLANE = 8
_MIN_ROWS_FOR_SPLIT = 512  # split batch across v7x's 2 TCs above this size


def _round_up(n: int, m: int) -> int:
    return ((n + m - 1) // m) * m


def mlp_kernel(x_ref, w1_ref, b1_ref, w2_ref, b2_ref, w3_ref, b3_ref, o_ref):
    # relu(relu(x@W1+b1)@W2+b2)@W3+b3
    # Three MXU matmuls (bf16 operands, f32 accumulation); bias-add / ReLU and
    # the x cast happen in f32/VPU inside the kernel (free under MXU/DMA).
    x = x_ref[...].astype(jnp.bfloat16)
    h1 = jnp.dot(x, w1_ref[...], preferred_element_type=jnp.float32) + b1_ref[...]
    h1 = jnp.maximum(h1, 0.0)
    h2 = (
        jnp.dot(h1.astype(jnp.bfloat16), w2_ref[...],
                preferred_element_type=jnp.float32)
        + b2_ref[...]
    )
    h2 = jnp.maximum(h2, 0.0)
    out = (
        jnp.dot(h2.astype(jnp.bfloat16), w3_ref[...],
                preferred_element_type=jnp.float32)
        + b3_ref[...]
    )
    o_ref[...] = out.astype(o_ref.dtype)


def prepare_params(w1, b1, w2, b2, w3, b3):
    """Pad only the hidden dim to 128 lanes; cast weights to bf16 (once, at init).

    Input dim (w1 rows) and output dim (w3 cols, b3) stay at their logical
    sizes so x needs no padding pass and the output writeback is logical-width.
    Zero padding of the hidden lanes is numerically inert (ReLU(0) = 0).
    Weight layout is (in_features, out_features); biases are (1, out_features).
    """
    k_in, h = w1.shape
    n_out = w3.shape[1]
    hp = _round_up(h, LANE)

    w1p = jnp.zeros((k_in, hp), jnp.float32).at[:, :h].set(w1).astype(jnp.bfloat16)
    w2p = jnp.zeros((hp, hp), jnp.float32).at[:h, :h].set(w2).astype(jnp.bfloat16)
    w3p = jnp.zeros((hp, n_out), jnp.float32).at[:h, :].set(w3).astype(jnp.bfloat16)
    b1p = jnp.zeros((1, hp), jnp.float32).at[:, :h].set(b1)
    b2p = jnp.zeros((1, hp), jnp.float32).at[:, :h].set(b2)
    b3p = jnp.asarray(b3, jnp.float32).reshape(1, n_out)

    # No Python ints in this dict -- it is passed through jit.
    return {"w1": w1p, "b1": b1p, "w2": w2p, "b2": b2p, "w3": w3p, "b3": b3p}


@functools.partial(jax.jit, static_argnames=("tb",))
def neural_net_forward(x, params, *, tb: int = 4096):
    """Forward pass of NeuralNet: relu(relu(x@W1+b1)@W2+b2)@W3+b3."""
    B, k_in = x.shape
    w1p, b1p = params["w1"], params["b1"]
    w2p, b2p = params["w2"], params["b2"]
    w3p, b3p = params["w3"], params["b3"]

    # Static shape checks only (no traced values in Python control flow).
    if k_in != w1p.shape[0]:
        raise ValueError(f"x has {k_in} features, expected {w1p.shape[0]}")
    hp = w1p.shape[1]
    n_out = w3p.shape[1]

    # Batch tile: big for large batches, shrunk for tiny ones, always a
    # multiple of 8 sublanes (robust to odd user-supplied tb).
    TB = _round_up(min(tb, _round_up(B, SUBLANE)), SUBLANE)
    # v7x: guarantee >= 2 grid steps for large batches so both TensorCores
    # get work on the "parallel" batch axis (no-op / harmless on v5e/v6e).
    if B >= _MIN_ROWS_FOR_SPLIT:
        TB = min(TB, _round_up(pl.cdiv(B, 2), SUBLANE))

    grid = (pl.cdiv(B, TB),)

    return pl.pallas_call(
        mlp_kernel,
        out_shape=jax.ShapeDtypeStruct((B, n_out), jnp.float32),
        grid_spec=pltpu.PrefetchScalarGridSpec(
            num_scalar_prefetch=0,
            grid=grid,
            in_specs=[
                pl.BlockSpec((TB, k_in), lambda i: (i, 0)),   # x: tiled over batch
                pl.BlockSpec((k_in, hp), lambda i: (0, 0)),   # w1: VMEM-resident
                pl.BlockSpec((1, hp), lambda i: (0, 0)),      # b1
                pl.BlockSpec((hp, hp), lambda i: (0, 0)),     # w2
                pl.BlockSpec((1, hp), lambda i: (0, 0)),      # b2
                pl.BlockSpec((hp, n_out), lambda i: (0, 0)),  # w3
                pl.BlockSpec((1, n_out), lambda i: (0, 0)),   # b3
            ],
            out_specs=pl.BlockSpec((TB, n_out), lambda i: (i, 0)),
        ),
        compiler_params=pltpu.CompilerParams(
            dimension_semantics=("parallel",),
            vmem_limit_bytes=32 * 1024 * 1024,
        ),
    )(x, w1p, b1p, w2p, b2p, w3p, b3p)


def init_params(key, input_size, hidden_size, output_size):
    # TODO(synk): original module loads weights from data.pth (torch checkpoint);
    # replaced with deterministic random init since no file I/O is allowed.
    ks = jax.random.split(key, 6)

    def linear(kw, kb, fan_in, fan_out):
        bound = 1.0 / jnp.sqrt(jnp.float32(fan_in))
        w = jax.random.uniform(kw, (fan_in, fan_out), jnp.float32, -bound, bound)
        b = jax.random.uniform(kb, (1, fan_out), jnp.float32, -bound, bound)
        return w, b

    w1, b1 = linear(ks[0], ks[1], input_size, hidden_size)
    w2, b2 = linear(ks[2], ks[3], hidden_size, hidden_size)
    w3, b3 = linear(ks[4], ks[5], hidden_size, output_size)
    return w1, b1, w2, b2, w3, b3


def _ref_forward_bf16(x, w1, b1, w2, b2, w3, b3):
    """Pure-JAX reference mirroring the kernel numerics (bf16 operands, f32 acc)."""
    f32, bf = jnp.float32, jnp.bfloat16
    h1 = jnp.maximum(x.astype(bf).astype(f32) @ w1.astype(bf).astype(f32) + b1, 0.0)
    h2 = jnp.maximum(h1.astype(bf).astype(f32) @ w2.astype(bf).astype(f32) + b2, 0.0)
    return h2.astype(bf).astype(f32) @ w3.astype(bf).astype(f32) + b3


def _ref_forward_f32(x, w1, b1, w2, b2, w3, b3):
    h1 = jnp.maximum(x @ w1 + b1, 0.0)
    h2 = jnp.maximum(h1 @ w2 + b2, 0.0)
    return h2 @ w3 + b3


if __name__ == "__main__":
    key = jax.random.PRNGKey(0)
    batch, input_size, hidden_size, output_size = 8, 64, 32, 16

    kx, kp, kx2 = jax.random.split(key, 3)
    x = jax.random.normal(kx, (batch, input_size), jnp.float32)
    w1, b1, w2, b2, w3, b3 = init_params(kp, input_size, hidden_size, output_size)
    params = prepare_params(w1, b1, w2, b2, w3, b3)

    # --- run 1: tiny batch (single grid step) ---
    out = neural_net_forward(x, params)
    out = jax.block_until_ready(out)
    assert out.shape == (batch, output_size)

    ref_bf16 = _ref_forward_bf16(x, w1, b1, w2, b2, w3, b3)
    ref_f32 = _ref_forward_f32(x, w1, b1, w2, b2, w3, b3)
    assert jnp.allclose(out, ref_bf16, atol=2e-3, rtol=1e-3), (
        float(jnp.max(jnp.abs(out - ref_bf16)))
    )
    # loose sanity check against full-f32 math (bf16 rounding of operands only)
    assert jnp.allclose(out, ref_f32, atol=5e-2, rtol=5e-2), (
        float(jnp.max(jnp.abs(out - ref_f32)))
    )

    # --- run 2: exercise multi-step grid + ragged (non-multiple-of-TB) batch ---
    batch2 = 40
    x2 = jax.random.normal(kx2, (batch2, input_size), jnp.float32)
    out2 = neural_net_forward(x2, params, tb=16)  # grid=(3,), last block partial (8 rows)
    out2 = jax.block_until_ready(out2)
    assert out2.shape == (batch2, output_size)
    ref2 = _ref_forward_bf16(x2, w1, b1, w2, b2, w3, b3)
    assert jnp.allclose(out2, ref2, atol=2e-3, rtol=1e-3), (
        float(jnp.max(jnp.abs(out2 - ref2)))
    )

    print("KERNEL_OK")
</pallas_src>

<mosaic_0001>
module attributes {stable_mosaic.version = 11 : i64} {
  func.func @mlp_kernel(%arg0: i32, %arg1: memref<8x64xf32, #tpu.memory_space<vmem>>, %arg2: memref<64x128xbf16, #tpu.memory_space<vmem>>, %arg3: memref<1x128xf32, #tpu.memory_space<vmem>>, %arg4: memref<128x128xbf16, #tpu.memory_space<vmem>>, %arg5: memref<1x128xf32, #tpu.memory_space<vmem>>, %arg6: memref<128x16xbf16, #tpu.memory_space<vmem>>, %arg7: memref<1x16xf32, #tpu.memory_space<vmem>>, %arg8: memref<8x16xf32, #tpu.memory_space<vmem>>) attributes {dimension_semantics = [#tpu.dimension_semantics<parallel>], iteration_bounds = array<i64: 1>, scalar_prefetch = 0 : i64, scratch_operands = 0 : i64, tpu.core_type = #tpu.core_type<tc>, window_params = [{transform_indices = @transform_0, window_bounds = array<i64: 8, 64>}, {pipeline_mode = #tpu.pipeline_mode<synchronous>, transform_indices = @transform_1, window_bounds = array<i64: 64, 128>}, {pipeline_mode = #tpu.pipeline_mode<synchronous>, transform_indices = @transform_2, window_bounds = array<i64: 1, 128>}, {pipeline_mode = #tpu.pipeline_mode<synchronous>, transform_indices = @transform_3, window_bounds = array<i64: 128, 128>}, {pipeline_mode = #tpu.pipeline_mode<synchronous>, transform_indices = @transform_4, window_bounds = array<i64: 1, 128>}, {pipeline_mode = #tpu.pipeline_mode<synchronous>, transform_indices = @transform_5, window_bounds = array<i64: 128, 16>}, {pipeline_mode = #tpu.pipeline_mode<synchronous>, transform_indices = @transform_6, window_bounds = array<i64: 1, 16>}, {transform_indices = @transform_7, window_bounds = array<i64: 8, 16>}]} {
    %c0 = arith.constant 0 : index
    %c0_0 = arith.constant 0 : index
    %0 = vector.load %arg1[%c0, %c0_0] : memref<8x64xf32, #tpu.memory_space<vmem>>, vector<8x64xf32>
    %1 = arith.truncf %0 : vector<8x64xf32> to vector<8x64xbf16>
    %c0_1 = arith.constant 0 : index
    %c0_2 = arith.constant 0 : index
    %2 = vector.load %arg2[%c0_1, %c0_2] : memref<64x128xbf16, #tpu.memory_space<vmem>>, vector<64x128xbf16>
    %cst = arith.constant dense<0.000000e+00> : vector<8x128xf32>
    %3 = tpu.matmul %1, %2, %cst {dimension_numbers = #tpu.dot_dimension_numbers<[1], [0], [0], [1], [0, 0, 1, 1], [], []>} : vector<8x64xbf16>, vector<64x128xbf16>, vector<8x128xf32> -> vector<8x128xf32>
    %c0_3 = arith.constant 0 : index
    %c0_4 = arith.constant 0 : index
    %4 = vector.load %arg3[%c0_3, %c0_4] : memref<1x128xf32, #tpu.memory_space<vmem>>, vector<1x128xf32>
    %5 = vector.broadcast %4 : vector<1x128xf32> to vector<8x128xf32>
    %6 = arith.addf %3, %5 : vector<8x128xf32>
    %cst_5 = arith.constant 0.000000e+00 : f32
    %7 = vector.broadcast %cst_5 : f32 to vector<8x128xf32>
    %8 = arith.maximumf %6, %7 : vector<8x128xf32>
    %9 = arith.truncf %8 : vector<8x128xf32> to vector<8x128xbf16>
    %c0_6 = arith.constant 0 : index
    %c0_7 = arith.constant 0 : index
    %10 = vector.load %arg4[%c0_6, %c0_7] : memref<128x128xbf16, #tpu.memory_space<vmem>>, vector<128x128xbf16>
    %cst_8 = arith.constant dense<0.000000e+00> : vector<8x128xf32>
    %11 = tpu.matmul %9, %10, %cst_8 {dimension_numbers = #tpu.dot_dimension_numbers<[1], [0], [0], [1], [0, 0, 1, 1], [], []>} : vector<8x128xbf16>, vector<128x128xbf16>, vector<8x128xf32> -> vector<8x128xf32>
    %c0_9 = arith.constant 0 : index
    %c0_10 = arith.constant 0 : index
    %12 = vector.load %arg5[%c0_9, %c0_10] : memref<1x128xf32, #tpu.memory_space<vmem>>, vector<1x128xf32>
    %13 = vector.broadcast %12 : vector<1x128xf32> to vector<8x128xf32>
    %14 = arith.addf %11, %13 : vector<8x128xf32>
    %cst_11 = arith.constant 0.000000e+00 : f32
    %15 = vector.broadcast %cst_11 : f32 to vector<8x128xf32>
    %16 = arith.maximumf %14, %15 : vector<8x128xf32>
    %17 = arith.truncf %16 : vector<8x128xf32> to vector<8x128xbf16>
    %c0_12 = arith.constant 0 : index
    %c0_13 = arith.constant 0 : index
    %18 = vector.load %arg6[%c0_12, %c0_13] : memref<128x16xbf16, #tpu.memory_space<vmem>>, vector<128x16xbf16>
    %cst_14 = arith.constant dense<0.000000e+00> : vector<8x16xf32>
    %19 = tpu.matmul %17, %18, %cst_14 {dimension_numbers = #tpu.dot_dimension_numbers<[1], [0], [0], [1], [0, 0, 1, 1], [], []>} : vector<8x128xbf16>, vector<128x16xbf16>, vector<8x16xf32> -> vector<8x16xf32>
    %c0_15 = arith.constant 0 : index
    %c0_16 = arith.constant 0 : index
    %20 = vector.load %arg7[%c0_15, %c0_16] : memref<1x16xf32, #tpu.memory_space<vmem>>, vector<1x16xf32>
    %21 = vector.broadcast %20 : vector<1x16xf32> to vector<8x16xf32>
    %22 = arith.addf %19, %21 : vector<8x16xf32>
    %c0_17 = arith.constant 0 : index
    %c0_18 = arith.constant 0 : index
    %23 = vector.load %arg8[%c0_17, %c0_18] : memref<8x16xf32, #tpu.memory_space<vmem>>, vector<8x16xf32>
    tpu.vector_store %arg8[%c0_17, %c0_18], %22 {strides = array<i32>} : memref<8x16xf32, #tpu.memory_space<vmem>>, vector<8x16xf32>,
    return
  }
  func.func @transform_0(%arg0: i32) -> (i32, i32) {
    %c0_i32 = arith.constant 0 : i32
    %c0_i32_0 = arith.constant 0 : i32
    return %arg0, %c0_i32 : i32, i32
  }
  func.func @transform_1(%arg0: i32) -> (i32, i32) {
    %c0_i32 = arith.constant 0 : i32
    %c0_i32_0 = arith.constant 0 : i32
    %c0_i32_1 = arith.constant 0 : i32
    return %c0_i32, %c0_i32_0 : i32, i32
  }
  func.func @transform_2(%arg0: i32) -> (i32, i32) {
    %c0_i32 = arith.constant 0 : i32
    %c0_i32_0 = arith.constant 0 : i32
    %c0_i32_1 = arith.constant 0 : i32
    return %c0_i32, %c0_i32_0 : i32, i32
  }
  func.func @transform_3(%arg0: i32) -> (i32, i32) {
    %c0_i32 = arith.constant 0 : i32
    %c0_i32_0 = arith.constant 0 : i32
    %c0_i32_1 = arith.constant 0 : i32
    return %c0_i32, %c0_i32_0 : i32, i32
  }
  func.func @transform_4(%arg0: i32) -> (i32, i32) {
    %c0_i32 = arith.constant 0 : i32
    %c0_i32_0 = arith.constant 0 : i32
    %c0_i32_1 = arith.constant 0 : i32
    return %c0_i32, %c0_i32_0 : i32, i32
  }
  func.func @transform_5(%arg0: i32) -> (i32, i32) {
    %c0_i32 = arith.constant 0 : i32
    %c0_i32_0 = arith.constant 0 : i32
    %c0_i32_1 = arith.constant 0 : i32
    return %c0_i32, %c0_i32_0 : i32, i32
  }
  func.func @transform_6(%arg0: i32) -> (i32, i32) {
    %c0_i32 = arith.constant 0 : i32
    %c0_i32_0 = arith.constant 0 : i32
    %c0_i32_1 = arith.constant 0 : i32
    return %c0_i32, %c0_i32_0 : i32, i32
  }
  func.func @transform_7(%arg0: i32) -> (i32, i32) {
    %c0_i32 = arith.constant 0 : i32
    %c0_i32_0 = arith.constant 0 : i32
    return %arg0, %c0_i32 : i32, i32
  }
}

</mosaic_0001>

<llo_original>
// kernel: neural_net_forward.1
$region0: #{neural_net_forward.1}
  #allocation0 [shape = 'u32[]', space=smem, size = 0x4, offset = 0x4, fixed_abs, tag = 'smem constant byte address 0x4 - core index']
  #allocation1 [shape = 'u32[144,128]{1,0:T(1,128)}', space=vmem, size = 0x12000, scoped, tag = 'internal scratch']
  %s0 = inlined_call_operand.vmem [shape: f32[8,64], index: 0, kind: input, shape index: {}]
  %s1 = inlined_call_operand.hbm [shape: bf16[64,128], index: 1, kind: input, shape index: {}]
  %s2 = inlined_call_operand.vmem [shape: f32[1,128], index: 2, kind: input, shape index: {}]
  %s3 = inlined_call_operand.vmem [shape: bf16[128,128], index: 3, kind: input, shape index: {}]
  %s4 = inlined_call_operand.vmem [shape: f32[1,128], index: 4, kind: input, shape index: {}]
  %s5 = inlined_call_operand.vmem [shape: bf16[128,16], index: 5, kind: input, shape index: {}]
  %s6 = inlined_call_operand.hbm [shape: f32[1,16], index: 6, kind: input, shape index: {}]
  %s7 = inlined_call_operand.hbm [shape: f32[8,16], index: 7, kind: output, shape index: {}]
  %s8 = sld [smem:[#allocation0]]
  $region46: #{neural_net_forward.1} parent=0
    _
  %s10 = ssub.s32 1, %s8
  %s11 = scalar_select 0, %s10, %s8
  $region1: #{neural_net_forward.1} parent=0
    #allocation2 [shape = 'u8[16384]{0}', space=vmem, size = 0x4000, scoped, tag = 'input window, operand 1, single buffered']
    #allocation3 [shape = 's32[1]{0}', space=sflag, size = 0x4, scoped, tag = 'scoped memory for neural_net_forward.1']
    #allocation4 [shape = 's32[1]{0}', space=sflag, size = 0x4, scoped, tag = 'scoped memory for neural_net_forward.1']
    #allocation5 [shape = 'u8[512]{0}', space=vmem, size = 0x400, scoped, tag = 'input window, operand 6, single buffered']
    #allocation6 [shape = 's32[1]{0}', space=sflag, size = 0x4, scoped, tag = 'scoped memory for neural_net_forward.1']
    #allocation7 [shape = 'u8[4096]{0}', space=vmem, size = 0x1000, scoped, tag = 'output window, operand 0, single buffered']
    %12 = vsyncpa [#allocation3], 0
    %13 = vsyncpa [#allocation6], 0
    %14 = vsyncpa [#allocation4], 0
    // Predicated region
    $region2: #{neural_net_forward.1} parent=1 // pred_check
      _
    $region3: #{neural_net_forward.1} parent=1 // pred_check_branch
      %16 = sbr.rel (0) target = $region5
    $region4: #{neural_net_forward.1} parent=1 // pred_region
      _
    $region5: #{neural_net_forward.1} parent=1 // pred_fallthru
      _
    // Predicated region
    $region6: #{neural_net_forward.1} parent=1 // pred_check
      _
    $region7: #{neural_net_forward.1} parent=1 // pred_check_branch
      %18 = sbr.rel (0) target = $region9
    $region8: #{neural_net_forward.1} parent=1 // pred_region
      %s20 = ssub.s32 512, 512
      %21 = vsyncadd [#allocation3], %s20
      %s22 = sshll.u32 [#allocation2], 4
      %s23 = int_to_ptr.vmem [resolvable:$true] %s22
      %28 = dma.hbm_to_vmem [thread:$0]  %s1, 512, %s23, [#allocation3], 64, 64, 4
    $region9: #{neural_net_forward.1} parent=1 // pred_fallthru
      _
    // Predicated region
    $region10: #{neural_net_forward.1} parent=1 // pred_check
      _
    $region11: #{neural_net_forward.1} parent=1 // pred_check_branch
      %30 = sbr.rel (0) target = $region13
    $region12: #{neural_net_forward.1} parent=1 // pred_region
      _
    $region13: #{neural_net_forward.1} parent=1 // pred_fallthru
      _
    // Predicated region
    $region14: #{neural_net_forward.1} parent=1 // pred_check
      _
    $region15: #{neural_net_forward.1} parent=1 // pred_check_branch
      %32 = sbr.rel (0) target = $region17
    $region16: #{neural_net_forward.1} parent=1 // pred_region
      _
    $region17: #{neural_net_forward.1} parent=1 // pred_fallthru
      _
    // Predicated region
    $region18: #{neural_net_forward.1} parent=1 // pred_check
      _
    $region19: #{neural_net_forward.1} parent=1 // pred_check_branch
      %34 = sbr.rel (0) target = $region21
    $region20: #{neural_net_forward.1} parent=1 // pred_region
      _
    $region21: #{neural_net_forward.1} parent=1 // pred_fallthru
      _
    // Predicated region
    $region22: #{neural_net_forward.1} parent=1 // pred_check
      _
    $region23: #{neural_net_forward.1} parent=1 // pred_check_branch
      %36 = sbr.rel (0) target = $region25
    $region24: #{neural_net_forward.1} parent=1 // pred_region
      _
    $region25: #{neural_net_forward.1} parent=1 // pred_fallthru
      _
    // Predicated region
    $region26: #{neural_net_forward.1} parent=1 // pred_check
      _
    $region27: #{neural_net_forward.1} parent=1 // pred_check_branch
      %38 = sbr.rel (0) target = $region29
    $region28: #{neural_net_forward.1} parent=1 // pred_region
      %s40 = ssub.s32 16, 16
      %41 = vsyncadd [#allocation6], %s40
      %s43 = sshll.u32 [#allocation5], 4
      %s44 = int_to_ptr.vmem [resolvable:$true] %s43
      %46 = dma.hbm_to_vmem [thread:$0]  %s6, 16, %s44, [#allocation6]
    $region29: #{neural_net_forward.1} parent=1 // pred_fallthru
      _
    // Predicated region
    $region30: #{neural_net_forward.1} parent=1 // pred_check
      _
    $region31: #{neural_net_forward.1} parent=1 // pred_check_branch
      %48 = sbr.rel (0) target = $region33
    $region32: #{neural_net_forward.1} parent=1 // pred_region
      %49 = dma.done [#allocation3], 512
    $region33: #{neural_net_forward.1} parent=1 // pred_fallthru
      _
    // Predicated region
    $region34: #{neural_net_forward.1} parent=1 // pred_check
      _
    $region35: #{neural_net_forward.1} parent=1 // pred_check_branch
      %51 = sbr.rel (0) target = $region37
    $region36: #{neural_net_forward.1} parent=1 // pred_region
      %52 = dma.done [#allocation6], 16
    $region37: #{neural_net_forward.1} parent=1 // pred_fallthru
      _
    %v54 = vld [vmem:[%s0] sm:$0xff]
    %v55 = vpack.c.bf16 %v54, %v54
    %v56 = vld [vmem:[#allocation2] sm:$0xf]
    %v57 = vld [vmem:[#allocation2 + $0x4] sm:$0xf]
    %v58 = vld [vmem:[#allocation2 + $0x8] sm:$0xf]
    %v59 = vld [vmem:[#allocation2 + $0xc] sm:$0xf]
    %v60 = vld [vmem:[#allocation2 + $0x10] sm:$0xf]
    %v61 = vld [vmem:[#allocation2 + $0x14] sm:$0xf]
    %v62 = vld [vmem:[#allocation2 + $0x18] sm:$0xf]
    %v63 = vld [vmem:[#allocation2 + $0x1c] sm:$0xf]
    %v64 = vld [vmem:[%s2] sm:$0x1]
    %v66 = vlaneseq
    %v67 = vshrl.u32 %v66, 7
    %v68 = vsub.s32 0, %v67
    %v69 = vrot.slane %v64, %v68
    %v79 = vunpack.c.l.b16 %v56
    %v80 = vunpack.c.l.b16 %v57
    %v81 = vunpack.c.l.b16 %v58
    %v82 = vunpack.c.l.b16 %v59
    %v83 = vunpack.c.l.b16 %v60
    %v84 = vunpack.c.l.b16 %v61
    %v85 = vunpack.c.l.b16 %v62
    %v86 = vunpack.c.l.b16 %v63
    %v87 = vpack.c.b16 %v80, %v79
    %v88 = vpack.c.b16 %v82, %v81
    %v89 = vpack.c.b16 %v84, %v83
    %v90 = vpack.c.b16 %v86, %v85
    %vm95 = vcmask 523264
    %v97 = vsel %vm95, %v55, 0
    %99 = vmatprep.subr.bf16.mxu0 0
    %100 = vmatpush1.bf16.msra.mxu0 0
    %101 = vmatprep.subr.bf16.mxu0 0
    %102 = vmatpush1.bf16.msra.mxu0 0
    %103 = vmatprep.subr.bf16.mxu0 0
    %104 = vmatpush1.bf16.msra.mxu0 0
    %105 = vmatprep.subr.bf16.mxu0 0
    %106 = vmatpush1.bf16.msra.mxu0 0
    %107 = vmatprep.subr.bf16.mxu0 0
    %108 = vmatpush1.bf16.msra.mxu0 %v90
    %109 = vmatprep.subr.bf16.mxu0 0
    %110 = vmatpush1.bf16.msra.mxu0 %v89
    %111 = vmatprep.subr.bf16.mxu0 0
    %112 = vmatpush1.bf16.msra.mxu0 %v88
    %113 = vmatprep.subr.bf16.mxu0 0
    %114 = vmatpush1.bf16.msra.mxu0 %v87
    %115 = vmatprep.subr.bf16.mxu0 0
    %116 = vmatpush2.bf16.msra.mxu0 0
    %117 = vmatprep.subr.bf16.mxu0 0
    %118 = vmatpush2.bf16.msra.mxu0 0
    %119 = vmatprep.subr.bf16.mxu0 0
    %120 = vmatpush2.bf16.msra.mxu0 0
    %121 = vmatprep.subr.bf16.mxu0 0
    %122 = vmatpush2.bf16.msra.mxu0 0
    %123 = vmatprep.subr.bf16.mxu0 0
    %124 = vmatpush2.bf16.msra.mxu0 0
    %125 = vmatprep.subr.bf16.mxu0 0
    %126 = vmatpush2.bf16.msra.mxu0 0
    %127 = vmatprep.subr.bf16.mxu0 0
    %128 = vmatpush2.bf16.msra.mxu0 0
    %129 = vmatprep.subr.bf16.mxu0 0
    %130 = vmatpush2.bf16.msra.mxu0 0
    %131 = vmatprep.mubr.bf16.mxu0 0
    %132 = vmatmul.mubr.bf16.gmra.mxu0 %v97
    %v133 = vpop.f32.mrf.mxu0
    %v134 = vadd.f32 %v69, %v133
    %v135 = vpop.f32.mrf.mxu0
    %v136 = vpop.f32.mrf.mxu0
    %v137 = vpop.f32.mrf.mxu0
    %138 = vdwg.mxu0
    %v139 = vmax.f32 %v134, 0.0
    %v140 = vpack.c.bf16 %v139, %v139
    %v141 = vld [vmem:[%s3] sm:$0xf]
    %v142 = vld [vmem:[%s3 + $0x4] sm:$0xf]
    %v143 = vld [vmem:[%s3 + $0x8] sm:$0xf]
    %v144 = vld [vmem:[%s3 + $0xc] sm:$0xf]
    %v145 = vld [vmem:[%s3 + $0x10] sm:$0xf]
    %v146 = vld [vmem:[%s3 + $0x14] sm:$0xf]
    %v147 = vld [vmem:[%s3 + $0x18] sm:$0xf]
    %v148 = vld [vmem:[%s3 + $0x1c] sm:$0xf]
    %v149 = vld [vmem:[%s3 + $0x20] sm:$0xf]
    %v150 = vld [vmem:[%s3 + $0x24] sm:$0xf]
    %v151 = vld [vmem:[%s3 + $0x28] sm:$0xf]
    %v152 = vld [vmem:[%s3 + $0x2c] sm:$0xf]
    %v153 = vld [vmem:[%s3 + $0x30] sm:$0xf]
    %v154 = vld [vmem:[%s3 + $0x34] sm:$0xf]
    %v155 = vld [vmem:[%s3 + $0x38] sm:$0xf]
    %v156 = vld [vmem:[%s3 + $0x3c] sm:$0xf]
    %v157 = vld [vmem:[%s4] sm:$0x1]
    %v159 = vlaneseq
    %v160 = vshrl.u32 %v159, 7
    %v161 = vsub.s32 0, %v160
    %v162 = vrot.slane %v157, %v161
    %v180 = vunpack.c.l.b16 %v141
    %v181 = vunpack.c.l.b16 %v142
    %v182 = vunpack.c.l.b16 %v143
    %v183 = vunpack.c.l.b16 %v144
    %v184 = vunpack.c.l.b16 %v145
    %v185 = vunpack.c.l.b16 %v146
    %v186 = vunpack.c.l.b16 %v147
    %v187 = vunpack.c.l.b16 %v148
    %v188 = vunpack.c.l.b16 %v149
    %v189 = vunpack.c.l.b16 %v150
    %v190 = vunpack.c.l.b16 %v151
    %v191 = vunpack.c.l.b16 %v152
    %v192 = vunpack.c.l.b16 %v153
    %v193 = vunpack.c.l.b16 %v154
    %v194 = vunpack.c.l.b16 %v155
    %v195 = vunpack.c.l.b16 %v156
    %v196 = vpack.c.b16 %v181, %v180
    %v197 = vpack.c.b16 %v183, %v182
    %v198 = vpack.c.b16 %v185, %v184
    %v199 = vpack.c.b16 %v187, %v186
    %v200 = vpack.c.b16 %v189, %v188
    %v201 = vpack.c.b16 %v191, %v190
    %v202 = vpack.c.b16 %v193, %v192
    %v203 = vpack.c.b16 %v195, %v194
    %212 = vmatprep.subr.bf16.mxu0 0
    %213 = vmatpush1.bf16.msra.mxu0 %v203
    %214 = vmatprep.subr.bf16.mxu0 0
    %215 = vmatpush1.bf16.msra.mxu0 %v202
    %216 = vmatprep.subr.bf16.mxu0 0
    %217 = vmatpush1.bf16.msra.mxu0 %v201
    %218 = vmatprep.subr.bf16.mxu0 0
    %219 = vmatpush1.bf16.msra.mxu0 %v200
    %220 = vmatprep.subr.bf16.mxu0 0
    %221 = vmatpush1.bf16.msra.mxu0 %v199
    %222 = vmatprep.subr.bf16.mxu0 0
    %223 = vmatpush1.bf16.msra.mxu0 %v198
    %224 = vmatprep.subr.bf16.mxu0 0
    %225 = vmatpush1.bf16.msra.mxu0 %v197
    %226 = vmatprep.subr.bf16.mxu0 0
    %227 = vmatpush1.bf16.msra.mxu0 %v196
    %228 = vmatprep.subr.bf16.mxu0 0
    %229 = vmatpush2.bf16.msra.mxu0 0
    %230 = vmatprep.subr.bf16.mxu0 0
    %231 = vmatpush2.bf16.msra.mxu0 0
    %232 = vmatprep.subr.bf16.mxu0 0
    %233 = vmatpush2.bf16.msra.mxu0 0
    %234 = vmatprep.subr.bf16.mxu0 0
    %235 = vmatpush2.bf16.msra.mxu0 0
    %236 = vmatprep.subr.bf16.mxu0 0
    %237 = vmatpush2.bf16.msra.mxu0 0
    %238 = vmatprep.subr.bf16.mxu0 0
    %239 = vmatpush2.bf16.msra.mxu0 0
    %240 = vmatprep.subr.bf16.mxu0 0
    %241 = vmatpush2.bf16.msra.mxu0 0
    %242 = vmatprep.subr.bf16.mxu0 0
    %243 = vmatpush2.bf16.msra.mxu0 0
    %244 = vmatprep.mubr.bf16.mxu0 0
    %245 = vmatmul.mubr.bf16.gmra.mxu0 %v140
    %v246 = vpop.f32.mrf.mxu0
    %v247 = vadd.f32 %v162, %v246
    %v248 = vpop.f32.mrf.mxu0
    %v249 = vpop.f32.mrf.mxu0
    %v250 = vpop.f32.mrf.mxu0
    %251 = vdwg.mxu0
    %v252 = vmax.f32 %v247, 0.0
    %v253 = vpack.c.bf16 %v252, %v252
    %v254 = vld [vmem:[%s5] sm:$0xf]
    %v255 = vld [vmem:[%s5 + $0x4] sm:$0xf]
    %v256 = vld [vmem:[%s5 + $0x8] sm:$0xf]
    %v257 = vld [vmem:[%s5 + $0xc] sm:$0xf]
    %v258 = vld [vmem:[%s5 + $0x10] sm:$0xf]
    %v259 = vld [vmem:[%s5 + $0x14] sm:$0xf]
    %v260 = vld [vmem:[%s5 + $0x18] sm:$0xf]
    %v261 = vld [vmem:[%s5 + $0x1c] sm:$0xf]
    %v262 = vld [vmem:[%s5 + $0x20] sm:$0xf]
    %v263 = vld [vmem:[%s5 + $0x24] sm:$0xf]
    %v264 = vld [vmem:[%s5 + $0x28] sm:$0xf]
    %v265 = vld [vmem:[%s5 + $0x2c] sm:$0xf]
    %v266 = vld [vmem:[%s5 + $0x30] sm:$0xf]
    %v267 = vld [vmem:[%s5 + $0x34] sm:$0xf]
    %v268 = vld [vmem:[%s5 + $0x38] sm:$0xf]
    %v269 = vld [vmem:[%s5 + $0x3c] sm:$0xf]
    %v270 = vld [vmem:[#allocation5] sm:$0x1]
    %v272 = vlaneseq
    %v273 = vshrl.u32 %v272, 7
    %v274 = vsub.s32 0, %v273
    %v275 = vrot.slane %v270, %v274
    %v293 = vunpack.c.l.b16 %v254
    %v294 = vunpack.c.l.b16 %v255
    %v295 = vunpack.c.l.b16 %v256
    %v296 = vunpack.c.l.b16 %v257
    %v297 = vunpack.c.l.b16 %v258
    %v298 = vunpack.c.l.b16 %v259
    %v299 = vunpack.c.l.b16 %v260
    %v300 = vunpack.c.l.b16 %v261
    %v301 = vunpack.c.l.b16 %v262
    %v302 = vunpack.c.l.b16 %v263
    %v303 = vunpack.c.l.b16 %v264
    %v304 = vunpack.c.l.b16 %v265
    %v305 = vunpack.c.l.b16 %v266
    %v306 = vunpack.c.l.b16 %v267
    %v307 = vunpack.c.l.b16 %v268
    %v308 = vunpack.c.l.b16 %v269
    %v309 = vpack.c.b16 %v294, %v293
    %v310 = vpack.c.b16 %v296, %v295
    %v311 = vpack.c.b16 %v298, %v297
    %v312 = vpack.c.b16 %v300, %v299
    %v313 = vpack.c.b16 %v302, %v301
    %v314 = vpack.c.b16 %v304, %v303
    %v315 = vpack.c.b16 %v306, %v305
    %v316 = vpack.c.b16 %v308, %v307
    %325 = vmatprep.subr.bf16.mxu0 0
    %326 = vmatpush1.bf16.msra.mxu0 %v316
    %327 = vmatprep.subr.bf16.mxu0 0
    %328 = vmatpush1.bf16.msra.mxu0 %v315
    %329 = vmatprep.subr.bf16.mxu0 0
    %330 = vmatpush1.bf16.msra.mxu0 %v314
    %331 = vmatprep.subr.bf16.mxu0 0
    %332 = vmatpush1.bf16.msra.mxu0 %v313
    %333 = vmatprep.subr.bf16.mxu0 0
    %334 = vmatpush1.bf16.msra.mxu0 %v312
    %335 = vmatprep.subr.bf16.mxu0 0
    %336 = vmatpush1.bf16.msra.mxu0 %v311
    %337 = vmatprep.subr.bf16.mxu0 0
    %338 = vmatpush1.bf16.msra.mxu0 %v310
    %339 = vmatprep.subr.bf16.mxu0 0
    %340 = vmatpush1.bf16.msra.mxu0 %v309
    %341 = vmatprep.subr.bf16.mxu0 0
    %342 = vmatpush2.bf16.msra.mxu0 0
    %343 = vmatprep.subr.bf16.mxu0 0
    %344 = vmatpush2.bf16.msra.mxu0 0
    %345 = vmatprep.subr.bf16.mxu0 0
    %346 = vmatpush2.bf16.msra.mxu0 0
    %347 = vmatprep.subr.bf16.mxu0 0
    %348 = vmatpush2.bf16.msra.mxu0 0
    %349 = vmatprep.subr.bf16.mxu0 0
    %350 = vmatpush2.bf16.msra.mxu0 0
    %351 = vmatprep.subr.bf16.mxu0 0
    %352 = vmatpush2.bf16.msra.mxu0 0
    %353 = vmatprep.subr.bf16.mxu0 0
    %354 = vmatpush2.bf16.msra.mxu0 0
    %355 = vmatprep.subr.bf16.mxu0 0
    %356 = vmatpush2.bf16.msra.mxu0 0
    %357 = vmatprep.mubr.bf16.mxu0 0
    %358 = vmatmul.mubr.bf16.gmra.mxu0 %v253
    %v359 = vpop.f32.mrf.mxu0
    %v360 = vadd.f32 %v275, %v359
    %v361 = vpop.f32.mrf.mxu0
    %v362 = vpop.f32.mrf.mxu0
    %v363 = vpop.f32.mrf.mxu0
    %364 = vdwg.mxu0
    %vm365 = vcmask 130048
    %366 = vst.msk [vmem:[#allocation7] sm:$0xff] %vm365, %v360
    // Predicated region
    $region38: #{neural_net_forward.1} parent=1 // pred_check
      _
    $region39: #{neural_net_forward.1} parent=1 // pred_check_branch
      %368 = sbr.rel (0) target = $region41
    $region40: #{neural_net_forward.1} parent=1 // pred_region
      %s370 = ssub.s32 128, 128
      %371 = vsyncadd [#allocation4], %s370
      %s373 = sshll.u32 [#allocation7], 4
      %s374 = int_to_ptr.vmem [resolvable:$true] %s373
      %376 = dma.vmem_to_hbm [thread:$0]  %s374, 128, %s7, [#allocation4]
    $region41: #{neural_net_forward.1} parent=1 // pred_fallthru
      _
    // Predicated region
    $region42: #{neural_net_forward.1} parent=1 // pred_check
      _
    $region43: #{neural_net_forward.1} parent=1 // pred_check_branch
      %378 = sbr.rel (0) target = $region45
    $region44: #{neural_net_forward.1} parent=1 // pred_region
      %379 = dma.done [#allocation4], 128
    $region45: #{neural_net_forward.1} parent=1 // pred_fallthru
      _
    %380 = vsyncpa [#allocation3], 1
    %381 = vsyncpa [#allocation6], 1
    %382 = vsyncpa [#allocation4], 1

</llo_original>
